<compile_context>
chip_gen: v5e
topology: v5e:2x2
jax: 0.10.0
libtpu: 0.0.40
codegen_flags: <defaults>
</compile_context>

<pallas_src>
import functools

import jax
import jax.numpy as jnp
from jax import lax
from jax.experimental import pallas as pl
from jax.experimental.pallas import tpu as pltpu

_LANES = 128
_CHUNK_COLS = 4096                       # in-kernel chunk width (multiple of 128)
_TARGET_BLOCK_BYTES = 8 * 1024 * 1024    # per-block VMEM footprint target
_VMEM_LIMIT_BYTES = 32 * 1024 * 1024     # safe on v5e / v6e / v7x
_DEFAULT_FALLBACK_BYTES = 1 * 1024 * 1024


def _round_up(a, b):
    return (a + b - 1) // b * b


def _round_down(a, b):
    return (a // b) * b


def _sublane_pack(dtype):
    # Sublane packing: 8 rows for 32-bit, 16 for 16-bit, 32 for 8-bit dtypes.
    return max(8, 32 // jnp.dtype(dtype).itemsize)


def _mean_reduce_kernel(x_ref, o_ref, acc_ref, *, k, tile_k, chunk, inv_k, ragged):
    r = pl.program_id(1)

    @pl.when(r == 0)
    def _():
        acc_ref[...] = jnp.zeros_like(acc_ref)

    tile_n = x_ref.shape[0]
    n_chunks = tile_k // chunk
    base_col = r * tile_k

    if ragged:
        # One iota, reused for every chunk; compare against the remaining valid
        # width.  Select (not multiply) so stale garbage / NaN in the partial
        # edge block can never leak into the sum.
        lane_idx = lax.broadcasted_iota(jnp.int32, (tile_n, chunk), 1)

    partial = jnp.zeros((tile_n, 1), jnp.float32)
    for j in range(n_chunks):  # static unroll, <= 64 chunks per block
        c = x_ref[:, j * chunk:(j + 1) * chunk].astype(jnp.float32)
        if ragged:
            limit = k - base_col - j * chunk
            c = jnp.where(lane_idx < limit, c, 0.0)
        partial = partial + jnp.sum(c, axis=-1, keepdims=True)

    acc_ref[...] += partial

    @pl.when(r == pl.num_programs(1) - 1)
    def _():
        o_ref[...] = (acc_ref[...] * inv_k).astype(o_ref.dtype)


def _choose_tiles(n, k, dtype, target_block_bytes):
    itemsize = jnp.dtype(dtype).itemsize
    pack = _sublane_pack(dtype)

    # N tiling: full extent for small batches (block dim == array dim is always
    # legal), otherwise one sublane-packed group.  Partial edge N blocks are
    # fine: garbage rows only produce garbage output rows that Pallas never
    # writes back.
    tile_n = n if n <= pack else pack

    # VMEM bytes per column, accounting for sublane padding of small tile_n.
    bytes_per_col = _round_up(tile_n, pack) * itemsize  # always >= 32

    k_cols = _round_up(k, _LANES)
    max_cols = max(_LANES, _round_down(target_block_bytes // bytes_per_col, _LANES))
    tile_k = min(k_cols, max_cols)

    chunk = min(tile_k, _CHUNK_COLS)
    tile_k = _round_down(tile_k, chunk)  # tile_k is a multiple of chunk (>= chunk)
    return tile_n, tile_k, chunk


def mean_reduce(x, *, fallback_bytes=_DEFAULT_FALLBACK_BYTES,
                target_block_bytes=_TARGET_BLOCK_BYTES):
    """Equivalent of MeanReduce.forward: mean over dims (1,2,3), keepdim=True."""
    n, c, h, w = x.shape
    k = c * h * w
    itemsize = jnp.dtype(x.dtype).itemsize

    if n * k * itemsize <= fallback_bytes:
        # Tiny tensors: pallas_call fixed overhead dominates; plain XLA reduce.
        return jnp.mean(x, axis=(1, 2, 3), keepdims=True).astype(x.dtype)

    tile_n, tile_k, chunk = _choose_tiles(n, k, x.dtype, target_block_bytes)
    grid = (pl.cdiv(n, tile_n), pl.cdiv(k, tile_k))
    ragged = (k % tile_k) != 0

    # Row-major, bitcast-compatible reshape: no pad, no extra HBM pass.
    x2d = x.reshape(n, k)

    kernel = functools.partial(
        _mean_reduce_kernel, k=k, tile_k=tile_k, chunk=chunk,
        inv_k=1.0 / float(k), ragged=ragged)

    out2d = pl.pallas_call(
        kernel,
        out_shape=jax.ShapeDtypeStruct((n, 1), x.dtype),
        grid=grid,
        in_specs=[pl.BlockSpec((tile_n, tile_k), lambda i, r: (i, r))],
        out_specs=pl.BlockSpec((tile_n, 1), lambda i, r: (i, 0)),
        scratch_shapes=[pltpu.VMEM((tile_n, 1), jnp.float32)],
        compiler_params=pltpu.CompilerParams(
            dimension_semantics=("parallel", "arbitrary"),
            vmem_limit_bytes=_VMEM_LIMIT_BYTES,
        ),
        cost_estimate=pl.CostEstimate(
            flops=n * k,
            transcendentals=0,
            bytes_accessed=n * k * itemsize + n * itemsize),
    )(x2d)

    return out2d.reshape(n, 1, 1, 1)


if __name__ == "__main__":
    key = jax.random.PRNGKey(0)

    # 1) Module-consistent small NCHW input; force the Pallas path.
    x = jax.random.normal(key, (2, 4, 16, 16), dtype=jnp.float32)
    out = jax.block_until_ready(mean_reduce(x, fallback_bytes=0))
    ref = jnp.mean(x, axis=(1, 2, 3), keepdims=True)
    assert out.shape == (2, 1, 1, 1), out.shape
    assert out.dtype == x.dtype, out.dtype
    assert jnp.allclose(out, ref, rtol=1e-5, atol=1e-6), (out, ref)

    # 2) Ragged K (K=315, not a multiple of 128): exercises in-kernel masking.
    x2 = jax.random.normal(jax.random.PRNGKey(1), (3, 5, 7, 9), dtype=jnp.float32)
    out2 = jax.block_until_ready(mean_reduce(x2, fallback_bytes=0))
    ref2 = jnp.mean(x2, axis=(1, 2, 3), keepdims=True)
    assert out2.shape == (3, 1, 1, 1), out2.shape
    assert jnp.allclose(out2, ref2, rtol=1e-5, atol=1e-6), (out2, ref2)

    # 3) Multi-step accumulation along the grid K axis (small block override).
    x3 = jax.random.normal(jax.random.PRNGKey(2), (4, 8, 64, 64), dtype=jnp.float32)
    out3 = jax.block_until_ready(
        mean_reduce(x3, fallback_bytes=0, target_block_bytes=64 * 1024))
    ref3 = jnp.mean(x3, axis=(1, 2, 3), keepdims=True)
    assert out3.shape == (4, 1, 1, 1), out3.shape
    assert jnp.allclose(out3, ref3, rtol=1e-5, atol=1e-6), (out3, ref3)

    # 4) bf16 input: f32 accumulation in-kernel, bf16 output.
    x4 = jax.random.normal(jax.random.PRNGKey(3), (2, 4, 16, 16)).astype(jnp.bfloat16)
    out4 = jax.block_until_ready(mean_reduce(x4, fallback_bytes=0))
    ref4 = jnp.mean(x4.astype(jnp.float32), axis=(1, 2, 3), keepdims=True)
    assert out4.shape == (2, 1, 1, 1), out4.shape
    assert out4.dtype == jnp.bfloat16, out4.dtype
    assert jnp.allclose(out4.astype(jnp.float32), ref4, rtol=5e-2, atol=5e-3), (out4, ref4)

    # 5) Small-input XLA fast path (default threshold).
    out5 = jax.block_until_ready(mean_reduce(x))
    assert jnp.allclose(out5, ref, rtol=1e-5, atol=1e-6), (out5, ref)

    print("KERNEL_OK")
</pallas_src>

<mosaic_0001>
module attributes {stable_mosaic.version = 11 : i64} {
  func.func @_mean_reduce_kernel(%arg0: i32, %arg1: i32, %arg2: memref<2x1024xf32, #tpu.memory_space<vmem>>, %arg3: memref<2x1xf32, #tpu.memory_space<vmem>>, %arg4: memref<2x1xf32, #tpu.memory_space<vmem>>) attributes {dimension_semantics = [#tpu.dimension_semantics<parallel>, #tpu.dimension_semantics<arbitrary>], iteration_bounds = array<i64: 1, 1>, scalar_prefetch = 0 : i64, scratch_operands = 1 : i64, tpu.core_type = #tpu.core_type<tc>, window_params = [{transform_indices = @transform_0, window_bounds = array<i64: 2, 1024>}, {transform_indices = @transform_1, window_bounds = array<i64: 2, 1>}]} {
    %c0_i32 = arith.constant 0 : i32
    %0 = arith.cmpi eq, %arg1, %c0_i32 : i32
    %1 = arith.extui %0 : i1 to i32
    %c0_i32_0 = arith.constant 0 : i32
    %2 = arith.cmpi ne, %1, %c0_i32_0 : i32
    scf.if %2 {
      %cst_9 = arith.constant 0.000000e+00 : f32
      %14 = vector.broadcast %cst_9 : f32 to vector<2x1xf32>
      %c0_10 = arith.constant 0 : index
      %c0_11 = arith.constant 0 : index
      %15 = vector.load %arg4[%c0_10, %c0_11] : memref<2x1xf32, #tpu.memory_space<vmem>>, vector<2x1xf32>
      tpu.vector_store %arg4[%c0_10, %c0_11], %14 {strides = array<i32>} : memref<2x1xf32, #tpu.memory_space<vmem>>, vector<2x1xf32>,
    } else {
    }
    %cst = arith.constant 0.000000e+00 : f32
    %3 = vector.broadcast %cst : f32 to vector<2x1xf32>
    %c0 = arith.constant 0 : index
    %c0_1 = arith.constant 0 : index
    %4 = vector.load %arg2[%c0, %c0_1] : memref<2x1024xf32, #tpu.memory_space<vmem>>, vector<2x1024xf32>
    %cst_2 = arith.constant dense<0.000000e+00> : vector<2xf32>
    %5 = vector.multi_reduction <add>, %4, %cst_2 [1] : vector<2x1024xf32> to vector<2xf32>
    %6 = vector.shape_cast %5 : vector<2xf32> to vector<2x1xf32>
    %7 = arith.addf %3, %6 : vector<2x1xf32>
    %c0_3 = arith.constant 0 : index
    %c0_4 = arith.constant 0 : index
    %8 = vector.load %arg4[%c0_3, %c0_4] : memref<2x1xf32, #tpu.memory_space<vmem>>, vector<2x1xf32>
    %9 = arith.addf %8, %7 : vector<2x1xf32>
    %c0_5 = arith.constant 0 : index
    %c0_6 = arith.constant 0 : index
    %10 = vector.load %arg4[%c0_5, %c0_6] : memref<2x1xf32, #tpu.memory_space<vmem>>, vector<2x1xf32>
    tpu.vector_store %arg4[%c0_5, %c0_6], %9 {strides = array<i32>} : memref<2x1xf32, #tpu.memory_space<vmem>>, vector<2x1xf32>,
    %c0_i32_7 = arith.constant 0 : i32
    %11 = arith.cmpi eq, %arg1, %c0_i32_7 : i32
    %12 = arith.extui %11 : i1 to i32
    %c0_i32_8 = arith.constant 0 : i32
    %13 = arith.cmpi ne, %12, %c0_i32_8 : i32
    scf.if %13 {
      %c0_9 = arith.constant 0 : index
      %c0_10 = arith.constant 0 : index
      %14 = vector.load %arg4[%c0_9, %c0_10] : memref<2x1xf32, #tpu.memory_space<vmem>>, vector<2x1xf32>
      %cst_11 = arith.constant 9.765625E-4 : f32
      %15 = vector.broadcast %cst_11 : f32 to vector<2x1xf32>
      %16 = arith.mulf %14, %15 : vector<2x1xf32>
      %c0_12 = arith.constant 0 : index
      %c0_13 = arith.constant 0 : index
      %17 = vector.load %arg3[%c0_12, %c0_13] : memref<2x1xf32, #tpu.memory_space<vmem>>, vector<2x1xf32>
      tpu.vector_store %arg3[%c0_12, %c0_13], %16 {strides = array<i32>} : memref<2x1xf32, #tpu.memory_space<vmem>>, vector<2x1xf32>,
    } else {
    }
    return
  }
  func.func @transform_0(%arg0: i32, %arg1: i32) -> (i32, i32) {
    %c0_i32 = arith.constant 0 : i32
    return %arg0, %arg1 : i32, i32
  }
  func.func @transform_1(%arg0: i32, %arg1: i32) -> (i32, i32) {
    %c0_i32 = arith.constant 0 : i32
    %c0_i32_0 = arith.constant 0 : i32
    return %arg0, %c0_i32 : i32, i32
  }
}

</mosaic_0001>

<llo_original>
// kernel: tpu_custom_call.1
$region0: #{tpu_custom_call.1}
  #allocation0 [shape = 'u32[]', space=smem, size = 0x4, offset = 0x4, fixed_abs, tag = 'smem constant byte address 0x4 - core index']
  #allocation1 [shape = 'u32[72,128]{1,0:T(1,128)}', space=vmem, size = 0x9000, scoped, tag = 'internal scratch']
  #allocation2 [shape = 'f32[2,1]{1,0:T(2,128)}', space=vmem, size = 0x400, scoped, tag = 'scratch operand']
  %s0 = inlined_call_operand.hbm [shape: f32[2,1024], index: 0, kind: input, shape index: {}]
  %s1 = inlined_call_operand.vmem [shape: f32[2,1], index: 1, kind: output, shape index: {}]
  %s2 = sld [smem:[#allocation0]]
  $region26: #{tpu_custom_call.1} parent=0
    _
  %s4 = ssub.s32 1, %s2
  %s5 = scalar_select 0, %s4, %s2
  $region1: #{tpu_custom_call.1} parent=0
    #allocation3 [shape = 'u8[8192]{0}', space=vmem, size = 0x2000, scoped, tag = 'input window, operand 0, single buffered']
    #allocation4 [shape = 's32[1]{0}', space=sflag, size = 0x4, scoped, tag = 'scoped memory for tpu_custom_call.1']
    %6 = vsyncpa [#allocation4], 0
    // Predicated region
    $region2: #{tpu_custom_call.1} parent=1 // pred_check
      _
    $region3: #{tpu_custom_call.1} parent=1 // pred_check_branch
      %8 = sbr.rel (0) target = $region5
    $region4: #{tpu_custom_call.1} parent=1 // pred_region
      %10 = vsyncadd [#allocation4], 0
      %s12 = sshll.u32 %s0, 4
      %s13 = int_to_ptr.hbm [resolvable:$true] %s12
      %s14 = sshll.u32 [#allocation3], 4
      %s15 = int_to_ptr.vmem [resolvable:$true] %s14
      %17 = dma.hbm_to_vmem [thread:$0]  %s13, 256, %s15, [#allocation4]
    $region5: #{tpu_custom_call.1} parent=1 // pred_fallthru
      _
    // Predicated region
    $region6: #{tpu_custom_call.1} parent=1 // pred_check
      _
    $region7: #{tpu_custom_call.1} parent=1 // pred_check_branch
      %19 = sbr.rel (0) target = $region9
    $region8: #{tpu_custom_call.1} parent=1 // pred_region
      %21 = dma.done [#allocation4], 256
    $region9: #{tpu_custom_call.1} parent=1 // pred_fallthru
      _
    %p22 = scmp.eq.s32.totalorder 0, 0
    // Predicated region
    $region10: #{tpu_custom_call.1} parent=1 // pred_check
      %p23 = pneg %p22
    $region11: #{tpu_custom_call.1} parent=1 // pred_check_branch
      %25 = sbr.rel (%p23) target = $region13
    $region12: #{tpu_custom_call.1} parent=1 // pred_region
      %vm26 = vcmask 1024
      %27 = vst.msk [vmem:[#allocation2] sm:$0x3] %vm26, 0.0
    $region13: #{tpu_custom_call.1} parent=1 // pred_fallthru
      _
    %v28 = vld [vmem:[#allocation3] sm:$0xff]
    %v29 = vld [vmem:[#allocation3 + $0x8] sm:$0xff]
    %32 = vst [vmem:[#allocation1] ss:$4 sm:$0xff] %v28
    %s33 = scalar_lea.vmem [#allocation1], 32
    %34 = vst [vmem:[%s33] ss:$4 sm:$0xff] %v29
    %v35 = vld.sshfl [vmem:[#allocation1] sm:$0xff pattern:$0x73625140]
    %v36 = vld.sshfl [vmem:[#allocation1 + $0x8] sm:$0xff pattern:$0x73625140]
    %v37 = vld.sshfl [vmem:[#allocation1 + $0x10] sm:$0xff pattern:$0x73625140]
    %v38 = vld.sshfl [vmem:[#allocation1 + $0x18] sm:$0xff pattern:$0x73625140]
    %v39 = vld.sshfl [vmem:[#allocation1 + $0x20] sm:$0xff pattern:$0x73625140]
    %v40 = vld.sshfl [vmem:[#allocation1 + $0x28] sm:$0xff pattern:$0x73625140]
    %v41 = vld.sshfl [vmem:[#allocation1 + $0x30] sm:$0xff pattern:$0x73625140]
    %v42 = vld.sshfl [vmem:[#allocation1 + $0x38] sm:$0xff pattern:$0x73625140]
    %vm51 = vcmask 1041408
    %v52 = vsel %vm51, %v35, 0.0
    %v53 = vsel %vm51, %v36, 0.0
    %v54 = vadd.f32 %v52, %v53
    %v55 = vsel %vm51, %v37, 0.0
    %v56 = vadd.f32 %v54, %v55
    %v57 = vsel %vm51, %v38, 0.0
    %v58 = vadd.f32 %v56, %v57
    %v59 = vsel %vm51, %v39, 0.0
    %v60 = vadd.f32 %v58, %v59
    %v61 = vsel %vm51, %v40, 0.0
    %v62 = vadd.f32 %v60, %v61
    %v63 = vsel %vm51, %v41, 0.0
    %v64 = vadd.f32 %v62, %v63
    %v65 = vsel %vm51, %v42, 0.0
    %v66 = vadd.f32 %v64, %v65
    %67 = vadd.xlane.f32.xlu0 %v66
    %v68 = vpop.xlane.xlu0 %67
    %v69 = vadd.f32 %v68, 0.0
    %v70 = vld [vmem:[#allocation2] sm:$0x3]
    %v71 = vadd.f32 %v70, %v69
    %vm72 = vcmask 1024
    %73 = vst.msk [vmem:[#allocation2] sm:$0x3] %vm72, %v71
    // Predicated region
    $region14: #{tpu_custom_call.1} parent=1 // pred_check
      %p74 = pneg %p22
    $region15: #{tpu_custom_call.1} parent=1 // pred_check_branch
      %76 = sbr.rel (%p74) target = $region17
    $region16: #{tpu_custom_call.1} parent=1 // pred_region
      %v77 = vld [vmem:[#allocation2] sm:$0x3]
      %v78 = vmul.f32 %v77, 0.0009765625
      %79 = vst.msk [vmem:[%s1] sm:$0x3] %vm72, %v78
    $region17: #{tpu_custom_call.1} parent=1 // pred_fallthru
      _
    // Predicated region
    $region18: #{tpu_custom_call.1} parent=1 // pred_check
      _
    $region19: #{tpu_custom_call.1} parent=1 // pred_check_branch
      %81 = sbr.rel (0) target = $region21
    $region20: #{tpu_custom_call.1} parent=1 // pred_region
      _
    $region21: #{tpu_custom_call.1} parent=1 // pred_fallthru
      _
    // Predicated region
    $region22: #{tpu_custom_call.1} parent=1 // pred_check
      _
    $region23: #{tpu_custom_call.1} parent=1 // pred_check_branch
      %83 = sbr.rel (0) target = $region25
    $region24: #{tpu_custom_call.1} parent=1 // pred_region
      _
    $region25: #{tpu_custom_call.1} parent=1 // pred_fallthru
      _
    %84 = vsyncpa [#allocation4], 1

</llo_original>
